<compile_context>
chip_gen: v6e
topology: v6e:2x2x1
jax: 0.10.0
libtpu: 0.0.40
codegen_flags: <defaults>
</compile_context>

<pallas_src>
import math

import jax
import jax.numpy as jnp
from jax.experimental import pallas as pl
from jax.experimental.pallas import tpu as pltpu

_MiB = 1024 * 1024


def make_positional_encoding_table(d_model, max_seq_length):
    """Mirrors the PyTorch buffer `pe` built in PositionalEncoding.__init__ (f32)."""
    position = jnp.arange(max_seq_length, dtype=jnp.float32)[:, None]
    div_term = jnp.exp(
        jnp.arange(0, d_model, 2, dtype=jnp.float32) * (-math.log(10000.0) / d_model)
    )
    angles = position * div_term                      # (max_seq_length, d_model // 2)
    pe = jnp.zeros((max_seq_length, d_model), dtype=jnp.float32)
    pe = pe.at[:, 0::2].set(jnp.sin(angles))
    pe = pe.at[:, 1::2].set(jnp.cos(angles))
    return pe


def _largest_divisor_leq(n, cap):
    """Largest divisor of n that is <= cap (>= 1)."""
    cap = max(1, min(int(n), int(cap)))
    for d in range(cap, 0, -1):
        if n % d == 0:
            return d
    return 1


def _vmem_plan():
    """(target_block_bytes, vmem_limit_bytes) tuned per generation, conservative fallback."""
    try:
        cap = pltpu.get_tpu_info().vmem_capacity_bytes
    except Exception:
        cap = None
    if cap is not None and cap <= 64 * _MiB:
        # v7x-class: high HBM BW, small physical VMEM -> big blocks, explicit headroom.
        return 6 * _MiB, 44 * _MiB
    if cap is not None:
        # v5e / v6e: 128 MiB physical; raise the scoped default (16 / 32 MiB).
        return 4 * _MiB, 64 * _MiB
    # Unknown backend: stay under every scoped default (6 blocks * 2 MiB = 12 MiB).
    return 2 * _MiB, None


def _add_pe_seq_kernel(x_ref, pe_ref, o_ref):
    # x_ref / o_ref: (tile_s, D) (batch dim squeezed); pe_ref: (tile_s, D) f32.
    # Mixed-dtype add promotes (bf16 + f32 -> f32), matching torch promotion.
    o_ref[...] = (x_ref[...] + pe_ref[...]).astype(o_ref.dtype)


def _add_pe_flat_kernel(x_ref, pe_ref, o_ref):
    # x_ref / o_ref: (B, tile_n); pe_ref: (1, tile_n) -> sublane-broadcast add.
    o_ref[...] = (x_ref[...] + pe_ref[...]).astype(o_ref.dtype)


@jax.jit
def positional_encoding(x, pe):
    """Forward of PositionalEncoding: x + pe[None, :S].  x: (B,S,D); pe: (max_seq_len, D) f32."""
    B, S, D = x.shape
    L = pe.shape[0]
    assert L >= S and pe.shape[1] == D

    out_dtype = jnp.result_type(x.dtype, pe.dtype)          # torch-style promotion
    itemsize = max(jnp.dtype(x.dtype).itemsize,
                   jnp.dtype(pe.dtype).itemsize,
                   jnp.dtype(out_dtype).itemsize)
    target_block_bytes, vmem_limit = _vmem_plan()

    if D % 128 == 0 and S % 8 == 0:
        # --- Lane-dense 3-D fast path ---------------------------------------------------
        # tile_s: multiple-of-8 divisor of S, sized so one (tile_s, D) block ~ target bytes.
        max_rows = max(8, (target_block_bytes // (D * itemsize)) // 8 * 8)
        tile_s = 8 * _largest_divisor_leq(S // 8, max_rows // 8)
        grid = (B, S // tile_s)
        return pl.pallas_call(
            _add_pe_seq_kernel,
            out_shape=jax.ShapeDtypeStruct((B, S, D), out_dtype),
            grid=grid,
            in_specs=[
                # x: batch dim squeezed (block of 1), sequence tiled, full D.
                pl.BlockSpec((None, tile_s, D), lambda b, s: (b, s, 0)),
                # pe: full (max_seq_len, D) buffer; index_map only touches rows < S.
                pl.BlockSpec((tile_s, D), lambda b, s: (s, 0)),
            ],
            out_specs=pl.BlockSpec((None, tile_s, D), lambda b, s: (b, s, 0)),
            compiler_params=pltpu.CompilerParams(
                dimension_semantics=("parallel", "parallel"),
                vmem_limit_bytes=vmem_limit),
        )(x, pe)

    # --- Fallback: flat lane-dense path (D not a multiple of 128) -----------------------
    # Reshapes are layout plumbing under jit; flat index s*D + d of the *full* PE table is
    # identical to pe[s, d], so no per-call slice of the buffer is needed.
    N = S * D
    xf = x.reshape(B, N)
    pef = pe.reshape(1, L * D)

    # A (B, tile_n) block pads B up to the sublane packing (8 for 32-bit, 16 for 16-bit,
    # 32 for 8-bit); budget from the *padded* row count so double-buffered in/out + the PE
    # block really stay inside the VMEM limit.
    sub = {1: 32, 2: 16}.get(jnp.dtype(x.dtype).itemsize, 8)
    b_padded = -(-B // sub) * sub
    max_tile = max(128, (target_block_bytes // (b_padded * itemsize)) // 128 * 128)
    if N % 128 == 0:
        # Divisor of N -> no ragged final block, every store is an unmasked full vst.
        tile_n = 128 * _largest_divisor_leq(N // 128, max_tile // 128)
    else:
        tile_n = N if N <= max_tile else max_tile   # ragged tail only for odd shapes
    grid = (pl.cdiv(N, tile_n),)
    # TODO(synk): if B ever gets large in this fallback path, tile the batch dim with a
    # 2-D grid instead of shrinking tile_n.
    out_flat = pl.pallas_call(
        _add_pe_flat_kernel,
        out_shape=jax.ShapeDtypeStruct((B, N), out_dtype),
        grid=grid,
        in_specs=[
            pl.BlockSpec((B, tile_n), lambda n: (0, n)),   # x tile (all batches, flat chunk)
            pl.BlockSpec((1, tile_n), lambda n: (0, n)),   # PE tile (shared across batch)
        ],
        out_specs=pl.BlockSpec((B, tile_n), lambda n: (0, n)),
        compiler_params=pltpu.CompilerParams(
            dimension_semantics=("parallel",),
            vmem_limit_bytes=vmem_limit),
    )(xf, pef)
    return out_flat.reshape(B, S, D)


if __name__ == "__main__":
    key = jax.random.PRNGKey(0)

    # Primary example (matches the module's small-shape hint): exercises the flat fallback
    # path since d_model=32 is not a multiple of 128.
    batch, seq, d_model = 2, 8, 32
    max_seq_length = 16
    pe = make_positional_encoding_table(d_model, max_seq_length)
    x = jax.random.normal(key, (batch, seq, d_model), dtype=jnp.float32)

    out = jax.block_until_ready(positional_encoding(x, pe))
    ref = x + pe[None, :seq, :]
    assert out.shape == (batch, seq, d_model)
    assert out.dtype == ref.dtype
    assert jnp.allclose(out, ref, atol=1e-6, rtol=1e-6)

    # Second (still small) shape exercising the lane-dense 3-D fast path: d_model = 128.
    d2, s2, L2 = 128, 16, 32
    pe2 = make_positional_encoding_table(d2, L2)
    x2 = jax.random.normal(jax.random.PRNGKey(0), (batch, s2, d2), dtype=jnp.float32)
    out2 = jax.block_until_ready(positional_encoding(x2, pe2))
    ref2 = x2 + pe2[None, :s2, :]
    assert out2.shape == (batch, s2, d2)
    assert jnp.allclose(out2, ref2, atol=1e-6, rtol=1e-6)

    print("KERNEL_OK")
</pallas_src>

<mosaic_0001>
module attributes {stable_mosaic.version = 11 : i64} {
  func.func @_add_pe_flat_kernel(%arg0: i32, %arg1: memref<2x256xf32, #tpu.memory_space<vmem>>, %arg2: memref<1x256xf32, #tpu.memory_space<vmem>>, %arg3: memref<2x256xf32, #tpu.memory_space<vmem>>) attributes {dimension_semantics = [#tpu.dimension_semantics<parallel>], iteration_bounds = array<i64: 1>, scalar_prefetch = 0 : i64, scratch_operands = 0 : i64, tpu.core_type = #tpu.core_type<tc>, window_params = [{transform_indices = @transform_0, window_bounds = array<i64: 2, 256>}, {transform_indices = @transform_1, window_bounds = array<i64: 1, 256>}, {transform_indices = @transform_2, window_bounds = array<i64: 2, 256>}]} {
    %c0 = arith.constant 0 : index
    %c0_0 = arith.constant 0 : index
    %0 = vector.load %arg1[%c0, %c0_0] : memref<2x256xf32, #tpu.memory_space<vmem>>, vector<2x256xf32>
    %c0_1 = arith.constant 0 : index
    %c0_2 = arith.constant 0 : index
    %1 = vector.load %arg2[%c0_1, %c0_2] : memref<1x256xf32, #tpu.memory_space<vmem>>, vector<1x256xf32>
    %2 = vector.broadcast %1 : vector<1x256xf32> to vector<2x256xf32>
    %3 = arith.addf %0, %2 : vector<2x256xf32>
    %c0_3 = arith.constant 0 : index
    %c0_4 = arith.constant 0 : index
    %4 = vector.load %arg3[%c0_3, %c0_4] : memref<2x256xf32, #tpu.memory_space<vmem>>, vector<2x256xf32>
    tpu.vector_store %arg3[%c0_3, %c0_4], %3 {strides = array<i32>} : memref<2x256xf32, #tpu.memory_space<vmem>>, vector<2x256xf32>,
    return
  }
  func.func @transform_0(%arg0: i32) -> (i32, i32) {
    %c0_i32 = arith.constant 0 : i32
    %c0_i32_0 = arith.constant 0 : i32
    return %c0_i32, %arg0 : i32, i32
  }
  func.func @transform_1(%arg0: i32) -> (i32, i32) {
    %c0_i32 = arith.constant 0 : i32
    %c0_i32_0 = arith.constant 0 : i32
    return %c0_i32, %arg0 : i32, i32
  }
  func.func @transform_2(%arg0: i32) -> (i32, i32) {
    %c0_i32 = arith.constant 0 : i32
    %c0_i32_0 = arith.constant 0 : i32
    return %c0_i32, %arg0 : i32, i32
  }
}

</mosaic_0001>

<llo_original>
// kernel: positional_encoding.1
$region0: #{positional_encoding.1}
  #allocation0 [shape = 'u32[]', space=smem, size = 0x4, offset = 0x4, fixed_abs, tag = 'smem constant byte address 0x4 - core index']
  #allocation1 [shape = 'u32[144,128]{1,0:T(1,128)}', space=vmem, size = 0x12000, scoped, tag = 'internal scratch']
  %s0 = inlined_call_operand.vmem [shape: f32[2,256], index: 0, kind: input, shape index: {}]
  %s1 = inlined_call_operand.vmem [shape: f32[1,512], index: 1, kind: input, shape index: {}]
  %s2 = inlined_call_operand.vmem [shape: f32[2,256], index: 2, kind: output, shape index: {}]
  %s3 = sld [smem:[#allocation0]]
  $region18: #{positional_encoding.1} parent=0
    _
  %s5 = ssub.s32 1, %s3
  %s6 = scalar_select 0, %s5, %s3
  // Predicated region
  $region2: #{positional_encoding.1} parent=0 // pred_check
    _
  $region3: #{positional_encoding.1} parent=0 // pred_check_branch
    %8 = sbr.rel (0) target = $region5
  $region4: #{positional_encoding.1} parent=0 // pred_region
    _
  $region5: #{positional_encoding.1} parent=0 // pred_fallthru
    _
  // Predicated region
  $region6: #{positional_encoding.1} parent=0 // pred_check
    _
  $region7: #{positional_encoding.1} parent=0 // pred_check_branch
    %10 = sbr.rel (0) target = $region9
  $region8: #{positional_encoding.1} parent=0 // pred_region
    _
  $region9: #{positional_encoding.1} parent=0 // pred_fallthru
    _
  %v11 = vld [vmem:[%s0] sm:$0xf]
  %v12 = vld [vmem:[%s1] sm:$0x3]
  %v14 = vlaneseq
  %v15 = vshrl.u32 %v14, 7
  %v16 = vsub.s32 0, %v15
  %v17 = vrot.slane %v12, %v16
  %v18 = vlaneseq
  %v19 = vshrl.u32 %v18, 7
  %v20 = vsub.s32 1, %v19
  %v21 = vrot.slane %v12, %v20
  %v22 = vcombine.low %v17, %v21
  %v24 = vunpack.c.l.s4 1983009808
  %v25 = vunpack.c.0.s8 %v24
  %v26 = vlaneseq
  %v27 = vshrl.u32 %v26, 7
  %v28 = vsub.s32 %v25, %v27
  %v29 = vrot.slane %v22, %v28
  %v31 = vadd.f32 %v11, %v29
  %32 = vst [vmem:[%s2] sm:$0xf] %v31
  // Predicated region
  $region10: #{positional_encoding.1} parent=0 // pred_check
    _
  $region11: #{positional_encoding.1} parent=0 // pred_check_branch
    %34 = sbr.rel (0) target = $region13
  $region12: #{positional_encoding.1} parent=0 // pred_region
    _
  $region13: #{positional_encoding.1} parent=0 // pred_fallthru
    _
  // Predicated region
  $region14: #{positional_encoding.1} parent=0 // pred_check
    _
  $region15: #{positional_encoding.1} parent=0 // pred_check_branch
    %36 = sbr.rel (0) target = $region17
  $region16: #{positional_encoding.1} parent=0 // pred_region
    _
  $region17: #{positional_encoding.1} parent=0 // pred_fallthru
    _

</llo_original>
